<compile_context>
chip_gen: v7x
topology: tpu7x:2x2x1
jax: 0.10.0
libtpu: 0.0.40
codegen_flags: <defaults>
</compile_context>

<pallas_src>
import jax
import jax.numpy as jnp
from jax import lax
from jax.experimental import pallas as pl
from jax.experimental.pallas import tpu as pltpu


_INV_SQRT2 = 0.7071067811865476


def _round_up(x, m):
    return ((x + m - 1) // m) * m


def _cdiv(a, b):
    return (a + b - 1) // b


def _gelu_erf(h):
    # exact GELU: x * (1 + erf(x / sqrt(2))) / 2  (matches the PyTorch module)
    return h * (1.0 + lax.erf(h * _INV_SQRT2)) * 0.5


# ---------------------------------------------------------------------------
# Kernels
# ---------------------------------------------------------------------------
def _ffn_kernel_f32out(x_ref, w1t_ref, w2t_ref, o_ref):
    """f32 output: o_ref itself is the accumulator (resident across the k axis)."""
    k = pl.program_id(1)
    x = x_ref[...].astype(w1t_ref.dtype)                       # bf16 MXU path
    h = jnp.dot(x, w1t_ref[...], preferred_element_type=jnp.float32)
    g = _gelu_erf(h)                                            # f32 GELU
    part = jnp.dot(g.astype(w2t_ref.dtype), w2t_ref[...],
                   preferred_element_type=jnp.float32)

    @pl.when(k == 0)
    def _():
        o_ref[...] = part

    @pl.when(k > 0)
    def _():
        o_ref[...] += part


def _ffn_kernel_scratch(x_ref, w1t_ref, w2t_ref, o_ref, acc_ref):
    """Low-precision output: accumulate in an f32 VMEM scratch, cast at the end."""
    k = pl.program_id(1)

    @pl.when(k == 0)
    def _():
        acc_ref[...] = jnp.zeros_like(acc_ref)

    x = x_ref[...].astype(w1t_ref.dtype)
    h = jnp.dot(x, w1t_ref[...], preferred_element_type=jnp.float32)
    g = _gelu_erf(h)
    acc_ref[...] += jnp.dot(g.astype(w2t_ref.dtype), w2t_ref[...],
                            preferred_element_type=jnp.float32)

    @pl.when(k == pl.num_programs(1) - 1)
    def _():
        o_ref[...] = acc_ref[...].astype(o_ref.dtype)


# ---------------------------------------------------------------------------
# Sizing helpers
# ---------------------------------------------------------------------------
def _default_vmem_limit_bytes():
    # ~87.5% of detected VMEM capacity (112 MiB on 128-MiB parts, 56 MiB on
    # 64-MiB v7x parts).  The h/g f32 intermediates count against this, so the
    # tile selector keeps an extra 20% of headroom on top.
    cap = 128 << 20
    try:
        info = pltpu.get_tpu_info()
        cap = int(getattr(info, "vmem_capacity_bytes", cap))
    except Exception:
        pass
    return int(min((cap * 7) // 8, 120 << 20))


def _estimate_vmem_bytes(tm, tk, d_model, x_isz, w_isz, o_isz, needs_scratch):
    x_blk = tm * d_model * x_isz
    w1_blk = d_model * tk * w_isz
    w2_blk = tk * d_model * w_isz
    o_blk = tm * d_model * o_isz
    pipelined = 2 * (x_blk + w1_blk + w2_blk + o_blk)   # double-buffered blocks
    scratch = tm * d_model * 4 if needs_scratch else 0  # f32 accumulator
    temps = 2 * tm * tk * 4                             # h and gelu(h) in f32
    return pipelined + scratch + temps


def _choose_tiles(M, d_model, d_fnn, x_isz, w_isz, o_isz, needs_scratch, budget):
    """Pick (tm, tk): maximize tm (weight reuse), shrink tk first to fit VMEM."""
    # Sublane pack: 16 when any operand is sub-32-bit (bf16), else 8.
    sp = 8 if (x_isz >= 4 and w_isz >= 4) else 16
    m_cap = _round_up(max(int(M), 1), sp)

    # Token-tile candidates, largest first.
    tm_cands = []
    for t in (1024, 512, 384, 256, 128):
        c = min(t, m_cap)
        if c not in tm_cands:
            tm_cands.append(c)
    # Prefer >= 2 token tiles so the "parallel" axis can shard across the two
    # v7x TensorCores (no effect on 1-TC v5e/v6e beyond pipelining).
    if m_cap >= 256:
        multi = [t for t in tm_cands if _cdiv(m_cap, t) >= 2]
        if multi:
            tm_cands = multi

    # d_fnn (reduction) tile candidates, largest first.
    tk_cands = []
    for t in (512, 256, 128):
        c = min(t, d_fnn)
        if c not in tk_cands:
            tk_cands.append(c)

    def best_tk(tm):
        for tk in tk_cands:      # shrink tk before giving up on this tm
            if _estimate_vmem_bytes(tm, tk, d_model, x_isz, w_isz, o_isz,
                                    needs_scratch) <= budget:
                return tk
        return None

    feasible = [(tm, best_tk(tm)) for tm in tm_cands]
    feasible = [(tm, tk) for tm, tk in feasible if tk is not None]
    if not feasible:
        # Best effort: smallest tiles; let the compiler report if it truly
        # cannot fit.
        return tm_cands[-1], tk_cands[-1]

    # Prefer the largest token tile whose M-padding waste is modest.
    for frac in (0.08, 0.2, 0.35, 1.01):
        for tm, tk in feasible:             # largest tm first
            padded = _cdiv(m_cap, tm) * tm
            if (padded - m_cap) <= frac * padded:
                return tm, tk
    return feasible[0]


# ---------------------------------------------------------------------------
# pallas_call builder + wrapper
# ---------------------------------------------------------------------------
def _build_ffn_call(tm, tk, d_model, M_pad, grid, out_dtype, needs_scratch,
                    vmem_limit_bytes, single_buffer_io):
    def io_spec(shape, index_map):
        # x / out block indices are constant along k -> single buffer is enough.
        if single_buffer_io:
            return pl.BlockSpec(shape, index_map, pipeline_mode=pl.Buffered(1))
        return pl.BlockSpec(shape, index_map)

    in_specs = [
        io_spec((tm, d_model), lambda i, k: (i, 0)),        # x token tile
        pl.BlockSpec((d_model, tk), lambda i, k: (0, k)),   # W1^T chunk
        pl.BlockSpec((tk, d_model), lambda i, k: (k, 0)),   # W2^T chunk
    ]
    out_spec = io_spec((tm, d_model), lambda i, k: (i, 0))

    if needs_scratch:
        kernel = _ffn_kernel_scratch
        scratch = [pltpu.VMEM((tm, d_model), jnp.float32)]
    else:
        kernel = _ffn_kernel_f32out
        scratch = []

    return pl.pallas_call(
        kernel,
        out_shape=jax.ShapeDtypeStruct((M_pad, d_model), out_dtype),
        grid_spec=pltpu.PrefetchScalarGridSpec(
            num_scalar_prefetch=0,
            grid=grid,
            in_specs=in_specs,
            out_specs=out_spec,
            scratch_shapes=scratch,
        ),
        compiler_params=pltpu.CompilerParams(
            dimension_semantics=("parallel", "arbitrary"),
            vmem_limit_bytes=int(vmem_limit_bytes),
        ),
    )


def prepare_ffn_weights(w1, w2, dtype=jnp.bfloat16):
    """One-time weight prep (OUTSIDE the hot path): transpose into (in, out)
    layout and cast to the MXU compute dtype (bf16 by default).

    w1: (d_fnn, d_model) nn.Linear layout -> w1t: (d_model, d_fnn)
    w2: (d_model, d_fnn) nn.Linear layout -> w2t: (d_fnn, d_model)
    """
    w1t = jnp.asarray(w1).T.astype(dtype)
    w2t = jnp.asarray(w2).T.astype(dtype)
    return w1t, w2t


def ffn_pallas(x, w1t, w2t, *, vmem_limit_bytes=None, reuse_io_buffers=True):
    """Computes w2 @ gelu(w1 @ x) per token, like the PyTorch FFN.

    x:   (..., d_model)  — any float dtype; cast to the weight dtype on the MXU,
                           accumulated in f32, output in x.dtype.
    w1t: (d_model, d_fnn)  (= w1.T, pre-transposed / pre-cast)
    w2t: (d_fnn, d_model)  (= w2.T, pre-transposed / pre-cast)
    """
    d_model = x.shape[-1]
    d_fnn = w1t.shape[1]
    assert w1t.shape == (d_model, d_fnn)
    assert w2t.shape == (d_fnn, d_model)

    out_dtype = x.dtype
    orig_shape = x.shape
    xm = x.reshape(-1, d_model)                 # (M, d_model)
    M = xm.shape[0]

    if vmem_limit_bytes is None:
        vmem_limit_bytes = _default_vmem_limit_bytes()
    budget = int(vmem_limit_bytes * 0.8)

    needs_scratch = (jnp.dtype(out_dtype) != jnp.dtype(jnp.float32))
    tm, tk = _choose_tiles(
        M, d_model, d_fnn,
        x_isz=xm.dtype.itemsize,
        w_isz=jnp.dtype(w1t.dtype).itemsize,
        o_isz=jnp.dtype(out_dtype).itemsize,
        needs_scratch=needs_scratch,
        budget=budget,
    )

    # Pad the token axis to a multiple of tm (padded rows produce zeros and are
    # sliced off) and the d_fnn axis to a multiple of tk (exact: gelu(0)=0 and
    # the padded w2t rows are zero).
    M_pad = _cdiv(M, tm) * tm
    if M_pad != M:
        xm = jnp.pad(xm, ((0, M_pad - M), (0, 0)))
    d_fnn_pad = _cdiv(d_fnn, tk) * tk
    if d_fnn_pad != d_fnn:
        w1t = jnp.pad(w1t, ((0, 0), (0, d_fnn_pad - d_fnn)))
        w2t = jnp.pad(w2t, ((0, d_fnn_pad - d_fnn), (0, 0)))

    grid = (M_pad // tm, d_fnn_pad // tk)
    single_buffer_io = bool(reuse_io_buffers) and grid[1] >= 2

    def run(use_single_buffer):
        call = _build_ffn_call(tm, tk, d_model, M_pad, grid, out_dtype,
                               needs_scratch, vmem_limit_bytes,
                               use_single_buffer)
        return call(xm, w1t, w2t)

    if single_buffer_io:
        try:
            out = run(True)
        except Exception:
            # pipeline_mode=pl.Buffered(1) unsupported on this build: fall back
            # to default double-buffered specs.
            out = run(False)
    else:
        out = run(False)

    if M_pad != M:
        out = out[:M]
    return out.reshape(orig_shape)


# ---------------------------------------------------------------------------
# Self-test
# ---------------------------------------------------------------------------
def _reference_ffn(x, w1, w2):
    h = x @ w1.T
    g = h * (1.0 + lax.erf(h / jnp.sqrt(2.0))) / 2.0
    return g @ w2.T


if __name__ == "__main__":
    key = jax.random.PRNGKey(0)

    # ---- Test 1 & 2: small shapes consistent with the module -------------
    B, S, d_model, d_fnn = 2, 8, 32, 64
    kx, kw1, kw2, kx2, kw3, kw4 = jax.random.split(key, 6)

    x = jax.random.normal(kx, (B, S, d_model), dtype=jnp.float32)
    w1 = (jax.random.uniform(kw1, (d_fnn, d_model), dtype=jnp.float32) - 0.5) \
        * (2.0 / jnp.sqrt(d_model))
    w2 = (jax.random.uniform(kw2, (d_model, d_fnn), dtype=jnp.float32) - 0.5) \
        * (2.0 / jnp.sqrt(d_fnn))
    y_ref = _reference_ffn(x, w1, w2)

    # Exact-parity path (f32 MXU) — strict tolerance.
    w1t_f32, w2t_f32 = prepare_ffn_weights(w1, w2, dtype=jnp.float32)
    y_f32 = jax.block_until_ready(ffn_pallas(x, w1t_f32, w2t_f32))
    assert y_f32.shape == y_ref.shape
    assert jnp.allclose(y_f32, y_ref, atol=1e-5, rtol=1e-5), "f32 path mismatch"

    # Default fast path (bf16 MXU, f32 accumulation) — bf16 tolerance.
    w1t_bf, w2t_bf = prepare_ffn_weights(w1, w2)     # bf16 by default
    y_bf = jax.block_until_ready(ffn_pallas(x, w1t_bf, w2t_bf))
    assert jnp.allclose(y_bf, y_ref, atol=3e-2, rtol=3e-2), "bf16 path mismatch"

    # ---- Test 3: multi-tile grid (token tiling + d_fnn reduction + padding)
    B2, S2, d_model2, d_fnn2 = 2, 160, 128, 640
    x2 = jax.random.normal(kx2, (B2, S2, d_model2), dtype=jnp.float32)
    w1b = (jax.random.uniform(kw3, (d_fnn2, d_model2), dtype=jnp.float32) - 0.5) \
        * (2.0 / jnp.sqrt(d_model2))
    w2b = (jax.random.uniform(kw4, (d_model2, d_fnn2), dtype=jnp.float32) - 0.5) \
        * (2.0 / jnp.sqrt(d_fnn2))
    y2_ref = _reference_ffn(x2, w1b, w2b)

    w1bt, w2bt = prepare_ffn_weights(w1b, w2b)       # bf16 fast path
    y2 = jax.block_until_ready(ffn_pallas(x2, w1bt, w2bt))
    assert y2.shape == y2_ref.shape
    assert jnp.allclose(y2, y2_ref, atol=3e-2, rtol=3e-2), "multi-tile mismatch"

    print("KERNEL_OK")
</pallas_src>

<mosaic_0001>
module attributes {stable_mosaic.version = 11 : i64} {
  func.func @_ffn_kernel_f32out(%arg0: i32, %arg1: i32, %arg2: memref<16x32xf32, #tpu.memory_space<vmem>>, %arg3: memref<32x64xf32, #tpu.memory_space<vmem>>, %arg4: memref<64x32xf32, #tpu.memory_space<vmem>>, %arg5: memref<16x32xf32, #tpu.memory_space<vmem>>) attributes {dimension_semantics = [#tpu.dimension_semantics<parallel>, #tpu.dimension_semantics<arbitrary>], iteration_bounds = array<i64: 1, 1>, scalar_prefetch = 0 : i64, scratch_operands = 0 : i64, tpu.core_type = #tpu.core_type<tc>, window_params = [{transform_indices = @transform_0, window_bounds = array<i64: 16, 32>}, {transform_indices = @transform_1, window_bounds = array<i64: 32, 64>}, {transform_indices = @transform_2, window_bounds = array<i64: 64, 32>}, {transform_indices = @transform_3, window_bounds = array<i64: 16, 32>}]} {
    %c0 = arith.constant 0 : index
    %c0_0 = arith.constant 0 : index
    %0 = vector.load %arg2[%c0, %c0_0] : memref<16x32xf32, #tpu.memory_space<vmem>>, vector<16x32xf32>
    %c0_1 = arith.constant 0 : index
    %c0_2 = arith.constant 0 : index
    %1 = vector.load %arg3[%c0_1, %c0_2] : memref<32x64xf32, #tpu.memory_space<vmem>>, vector<32x64xf32>
    %cst = arith.constant dense<0.000000e+00> : vector<16x64xf32>
    %2 = tpu.matmul %0, %1, %cst {dimension_numbers = #tpu.dot_dimension_numbers<[1], [0], [0], [1], [0, 0, 1, 1], [], []>} : vector<16x32xf32>, vector<32x64xf32>, vector<16x64xf32> -> vector<16x64xf32>
    %cst_3 = arith.constant 0.707106769 : f32
    %3 = vector.broadcast %cst_3 : f32 to vector<16x64xf32>
    %4 = arith.mulf %2, %3 : vector<16x64xf32>
    %5 = math.erf %4 : vector<16x64xf32>
    %cst_4 = arith.constant 1.000000e+00 : f32
    %6 = vector.broadcast %cst_4 : f32 to vector<16x64xf32>
    %7 = arith.addf %6, %5 : vector<16x64xf32>
    %8 = arith.mulf %2, %7 : vector<16x64xf32>
    %cst_5 = arith.constant 5.000000e-01 : f32
    %9 = vector.broadcast %cst_5 : f32 to vector<16x64xf32>
    %10 = arith.mulf %8, %9 : vector<16x64xf32>
    %c0_6 = arith.constant 0 : index
    %c0_7 = arith.constant 0 : index
    %11 = vector.load %arg4[%c0_6, %c0_7] : memref<64x32xf32, #tpu.memory_space<vmem>>, vector<64x32xf32>
    %cst_8 = arith.constant dense<0.000000e+00> : vector<16x32xf32>
    %12 = tpu.matmul %10, %11, %cst_8 {dimension_numbers = #tpu.dot_dimension_numbers<[1], [0], [0], [1], [0, 0, 1, 1], [], []>} : vector<16x64xf32>, vector<64x32xf32>, vector<16x32xf32> -> vector<16x32xf32>
    %c0_i32 = arith.constant 0 : i32
    %13 = arith.cmpi eq, %arg1, %c0_i32 : i32
    %14 = arith.extui %13 : i1 to i32
    %c0_i32_9 = arith.constant 0 : i32
    %15 = arith.cmpi ne, %14, %c0_i32_9 : i32
    scf.if %15 {
      %c0_12 = arith.constant 0 : index
      %c0_13 = arith.constant 0 : index
      %19 = vector.load %arg5[%c0_12, %c0_13] : memref<16x32xf32, #tpu.memory_space<vmem>>, vector<16x32xf32>
      tpu.vector_store %arg5[%c0_12, %c0_13], %12 {strides = array<i32>} : memref<16x32xf32, #tpu.memory_space<vmem>>, vector<16x32xf32>,
    } else {
    }
    %c0_i32_10 = arith.constant 0 : i32
    %16 = arith.cmpi sgt, %arg1, %c0_i32_10 : i32
    %17 = arith.extui %16 : i1 to i32
    %c0_i32_11 = arith.constant 0 : i32
    %18 = arith.cmpi ne, %17, %c0_i32_11 : i32
    scf.if %18 {
      %c0_12 = arith.constant 0 : index
      %c0_13 = arith.constant 0 : index
      %19 = vector.load %arg5[%c0_12, %c0_13] : memref<16x32xf32, #tpu.memory_space<vmem>>, vector<16x32xf32>
      %20 = arith.addf %19, %12 : vector<16x32xf32>
      %c0_14 = arith.constant 0 : index
      %c0_15 = arith.constant 0 : index
      %21 = vector.load %arg5[%c0_14, %c0_15] : memref<16x32xf32, #tpu.memory_space<vmem>>, vector<16x32xf32>
      tpu.vector_store %arg5[%c0_14, %c0_15], %20 {strides = array<i32>} : memref<16x32xf32, #tpu.memory_space<vmem>>, vector<16x32xf32>,
    } else {
    }
    return
  }
  func.func @transform_0(%arg0: i32, %arg1: i32) -> (i32, i32) {
    %c0_i32 = arith.constant 0 : i32
    %c0_i32_0 = arith.constant 0 : i32
    return %arg0, %c0_i32 : i32, i32
  }
  func.func @transform_1(%arg0: i32, %arg1: i32) -> (i32, i32) {
    %c0_i32 = arith.constant 0 : i32
    %c0_i32_0 = arith.constant 0 : i32
    return %c0_i32, %arg1 : i32, i32
  }
  func.func @transform_2(%arg0: i32, %arg1: i32) -> (i32, i32) {
    %c0_i32 = arith.constant 0 : i32
    %c0_i32_0 = arith.constant 0 : i32
    return %arg1, %c0_i32 : i32, i32
  }
  func.func @transform_3(%arg0: i32, %arg1: i32) -> (i32, i32) {
    %c0_i32 = arith.constant 0 : i32
    %c0_i32_0 = arith.constant 0 : i32
    return %arg0, %c0_i32 : i32, i32
  }
}

</mosaic_0001>

<llo_original>
// kernel: tpu_custom_call.1
$region0: #{tpu_custom_call.1}
  #allocation0 [shape = 'u32[]', space=smem, size = 0x4, offset = 0x4, fixed_abs, tag = 'smem constant byte address 0x4 - core index']
  #allocation1 [shape = 'u32[144,128]{1,0:T(1,128)}', space=vmem, size = 0x12000, scoped, tag = 'internal scratch']
  %s0 = inlined_call_operand.hbm [shape: f32[16,32], index: 0, kind: input, shape index: {}]
  %s1 = inlined_call_operand.hbm [shape: f32[32,64], index: 1, kind: input, shape index: {}]
  %s2 = inlined_call_operand.hbm [shape: f32[64,32], index: 2, kind: input, shape index: {}]
  %s3 = inlined_call_operand.hbm [shape: f32[16,32], index: 3, kind: output, shape index: {}]
  %s4 = sld [smem:[#allocation0]]
  $region42: #{tpu_custom_call.1} parent=0
    _
  %s6 = ssub.s32 1, %s4
  %s7 = scalar_select 0, %s6, %s4
  $region1: #{tpu_custom_call.1} parent=0
    #allocation2 [shape = 'u8[8192]{0}', space=vmem, size = 0x2000, scoped, tag = 'input window, operand 0, single buffered']
    #allocation3 [shape = 's32[1]{0}', space=sflag, size = 0x4, scoped, tag = 'scoped memory for tpu_custom_call.1']
    #allocation4 [shape = 's32[1]{0}', space=sflag, size = 0x4, scoped, tag = 'scoped memory for tpu_custom_call.1']
    #allocation5 [shape = 'u8[16384]{0}', space=vmem, size = 0x4000, scoped, tag = 'input window, operand 1, single buffered']
    #allocation6 [shape = 's32[1]{0}', space=sflag, size = 0x4, scoped, tag = 'scoped memory for tpu_custom_call.1']
    #allocation7 [shape = 'u8[32768]{0}', space=vmem, size = 0x8000, scoped, tag = 'input window, operand 2, single buffered']
    #allocation8 [shape = 'u8[8192]{0}', space=vmem, size = 0x2000, scoped, tag = 'output window, operand 0, single buffered']
    %8 = vsyncpa [#allocation3], 0
    %9 = vsyncpa [#allocation6], 0
    %10 = vsyncpa [#allocation4], 0
    // Predicated region
    $region2: #{tpu_custom_call.1} parent=1 // pred_check
      _
    $region3: #{tpu_custom_call.1} parent=1 // pred_check_branch
      %12 = sbr.rel (0) target = $region5
    $region4: #{tpu_custom_call.1} parent=1 // pred_region
      %s14 = ssub.s32 256, 256
      %15 = vsyncadd [#allocation3], %s14
      %s16 = sshll.u32 [#allocation2], 4
      %s17 = int_to_ptr.vmem [resolvable:$true] %s16
      %22 = dma.hbm_to_vmem [thread:$0]  %s0, 256, %s17, [#allocation3], 128, 128, 8
    $region5: #{tpu_custom_call.1} parent=1 // pred_fallthru
      _
    // Predicated region
    $region6: #{tpu_custom_call.1} parent=1 // pred_check
      _
    $region7: #{tpu_custom_call.1} parent=1 // pred_check_branch
      %24 = sbr.rel (0) target = $region9
    $region8: #{tpu_custom_call.1} parent=1 // pred_region
      %s26 = ssub.s32 512, 512
      %27 = vsyncadd [#allocation6], %s26
      %s28 = sshll.u32 [#allocation5], 4
      %s29 = int_to_ptr.vmem [resolvable:$true] %s28
      %34 = dma.hbm_to_vmem [thread:$0]  %s1, 512, %s29, [#allocation6], 128, 128, 8
    $region9: #{tpu_custom_call.1} parent=1 // pred_fallthru
      _
    // Predicated region
    $region10: #{tpu_custom_call.1} parent=1 // pred_check
      _
    $region11: #{tpu_custom_call.1} parent=1 // pred_check_branch
      %36 = sbr.rel (0) target = $region13
    $region12: #{tpu_custom_call.1} parent=1 // pred_region
      %s38 = ssub.s32 1024, 1024
      %39 = vsyncadd [#allocation6], %s38
      %s40 = sshll.u32 [#allocation7], 4
      %s41 = int_to_ptr.vmem [resolvable:$true] %s40
      %46 = dma.hbm_to_vmem [thread:$0]  %s2, 1024, %s41, [#allocation6], 128, 128, 8
    $region13: #{tpu_custom_call.1} parent=1 // pred_fallthru
      _
    // Predicated region
    $region14: #{tpu_custom_call.1} parent=1 // pred_check
      _
    $region15: #{tpu_custom_call.1} parent=1 // pred_check_branch
      %48 = sbr.rel (0) target = $region17
    $region16: #{tpu_custom_call.1} parent=1 // pred_region
      %49 = dma.done [#allocation3], 256
    $region17: #{tpu_custom_call.1} parent=1 // pred_fallthru
      _
    // Predicated region
    $region18: #{tpu_custom_call.1} parent=1 // pred_check
      _
    $region19: #{tpu_custom_call.1} parent=1 // pred_check_branch
      %51 = sbr.rel (0) target = $region21
    $region20: #{tpu_custom_call.1} parent=1 // pred_region
      %52 = dma.done [#allocation6], 512
    $region21: #{tpu_custom_call.1} parent=1 // pred_fallthru
      _
    // Predicated region
    $region22: #{tpu_custom_call.1} parent=1 // pred_check
      _
    $region23: #{tpu_custom_call.1} parent=1 // pred_check_branch
      %54 = sbr.rel (0) target = $region25
    $region24: #{tpu_custom_call.1} parent=1 // pred_region
      %55 = dma.done [#allocation6], 1024
    $region25: #{tpu_custom_call.1} parent=1 // pred_fallthru
      _
    %v56 = vld [vmem:[#allocation2] sm:$0xff]
    %v57 = vld [vmem:[#allocation2 + $0x8] sm:$0xff]
    %v58 = vld [vmem:[#allocation5] sm:$0xff]
    %v59 = vld [vmem:[#allocation5 + $0x8] sm:$0xff]
    %v60 = vld [vmem:[#allocation5 + $0x10] sm:$0xff]
    %v61 = vld [vmem:[#allocation5 + $0x18] sm:$0xff]
    %vm62 = vcmask 261120
    %v64 = vsel %vm62, %v56, 0
    %v67 = vsel %vm62, %v57, 0
    %69 = vmatprep.subr.mxu0 0.0
    %70 = vmatpush1.msra.mxu0 %v58
    %71 = vmatprep.subr.mxu0 0.0
    %72 = vmatpush1.msra.mxu0 %v59
    %73 = vmatprep.subr.mxu0 0.0
    %74 = vmatpush1.msra.mxu0 %v60
    %75 = vmatprep.subr.mxu0 0.0
    %76 = vmatpush1.msra.mxu0 %v61
    %77 = vmatprep.subr.mxu0 0.0
    %78 = vmatpush1.msra.mxu0 0.0
    %79 = vmatprep.subr.mxu0 0.0
    %80 = vmatpush1.msra.mxu0 0.0
    %81 = vmatprep.subr.mxu0 0.0
    %82 = vmatpush1.msra.mxu0 0.0
    %83 = vmatprep.subr.mxu0 0.0
    %84 = vmatpush1.msra.mxu0 0.0
    %85 = vmatprep.subr.mxu0 0.0
    %86 = vmatpush1.msra.mxu0 0.0
    %87 = vmatprep.subr.mxu0 0.0
    %88 = vmatpush1.msra.mxu0 0.0
    %89 = vmatprep.subr.mxu0 0.0
    %90 = vmatpush1.msra.mxu0 0.0
    %91 = vmatprep.subr.mxu0 0.0
    %92 = vmatpush1.msra.mxu0 0.0
    %93 = vmatprep.subr.mxu0 0.0
    %94 = vmatpush1.msra.mxu0 0.0
    %95 = vmatprep.subr.mxu0 0.0
    %96 = vmatpush1.msra.mxu0 0.0
    %97 = vmatprep.subr.mxu0 0.0
    %98 = vmatpush1.msra.mxu0 0.0
    %99 = vmatprep.subr.mxu0 0.0
    %100 = vmatpush1.msra.mxu0 0.0
    %101 = vmatprep.subr.mxu0 0.0
    %102 = vmatpush1.msra.mxu0 0.0
    %103 = vmatprep.subr.mxu0 0.0
    %104 = vmatpush1.msra.mxu0 0.0
    %105 = vmatprep.subr.mxu0 0.0
    %106 = vmatpush1.msra.mxu0 0.0
    %107 = vmatprep.subr.mxu0 0.0
    %108 = vmatpush1.msra.mxu0 0.0
    %109 = vmatprep.subr.mxu0 0.0
    %110 = vmatpush1.msra.mxu0 0.0
    %111 = vmatprep.subr.mxu0 0.0
    %112 = vmatpush1.msra.mxu0 0.0
    %113 = vmatprep.subr.mxu0 0.0
    %114 = vmatpush1.msra.mxu0 0.0
    %115 = vmatprep.subr.mxu0 0.0
    %116 = vmatpush1.msra.mxu0 0.0
    %117 = vmatprep.subr.mxu0 0.0
    %118 = vmatpush1.msra.mxu0 0.0
    %119 = vmatprep.subr.mxu0 0.0
    %120 = vmatpush1.msra.mxu0 0.0
    %121 = vmatprep.subr.mxu0 0.0
    %122 = vmatpush1.msra.mxu0 0.0
    %123 = vmatprep.subr.mxu0 0.0
    %124 = vmatpush1.msra.mxu0 0.0
    %125 = vmatprep.subr.mxu0 0.0
    %126 = vmatpush1.msra.mxu0 0.0
    %127 = vmatprep.subr.mxu0 0.0
    %128 = vmatpush1.msra.mxu0 0.0
    %129 = vmatprep.subr.mxu0 0.0
    %130 = vmatpush1.msra.mxu0 0.0
    %131 = vmatprep.subr.mxu0 0.0
    %132 = vmatpush1.msra.mxu0 0.0
    %133 = vmatprep.mubr.f32.mxu0 0.0
    %134 = vmatmul.mubr.f32.gmra.mrb[0].mxu0 %v64
    %v135 = vpop.f32.mrb[0].mxu0
    %v136 = vadd.f32 0.0, %v135
    %v137 = vpop.f32.mrb[0].mxu0
    %138 = vmatprep.mubr.f32.mxu0 0.0
    %139 = vmatmul.mubr.f32.gmra.mrb[0].mxu0 %v67
    %v140 = vpop.f32.mrb[0].mxu0
    %v141 = vadd.f32 0.0, %v140
    %v142 = vpop.f32.mrb[0].mxu0
    %143 = vdwg.mxu0
    %v144 = vmul.f32 %v136, 0.70710677
    %v145 = vmul.f32 %v141, 0.70710677
    %v146 = verf.f32.pop %v144
    %v147 = verf.f32.pop %v145
    %v148 = vadd.f32 %v146, 1.0
    %v149 = vadd.f32 %v147, 1.0
    %v150 = vmul.f32 %v136, %v148
    %v151 = vmul.f32 %v141, %v149
    %v152 = vmul.f32 %v150, 0.5
    %v153 = vmul.f32 %v151, 0.5
    %v154 = vld [vmem:[#allocation7] sm:$0xff]
    %v155 = vld [vmem:[#allocation7 + $0x8] sm:$0xff]
    %v156 = vld [vmem:[#allocation7 + $0x10] sm:$0xff]
    %v157 = vld [vmem:[#allocation7 + $0x18] sm:$0xff]
    %v158 = vld [vmem:[#allocation7 + $0x20] sm:$0xff]
    %v159 = vld [vmem:[#allocation7 + $0x28] sm:$0xff]
    %v160 = vld [vmem:[#allocation7 + $0x30] sm:$0xff]
    %v161 = vld [vmem:[#allocation7 + $0x38] sm:$0xff]
    %vm162 = vcmask 523264
    %v164 = vsel %vm162, %v152, 0
    %v167 = vsel %vm162, %v153, 0
    %169 = vmatprep.subr.mxu0 0.0
    %170 = vmatpush1.msra.mxu0 %v154
    %171 = vmatprep.subr.mxu0 0.0
    %172 = vmatpush1.msra.mxu0 %v155
    %173 = vmatprep.subr.mxu0 0.0
    %174 = vmatpush1.msra.mxu0 %v156
    %175 = vmatprep.subr.mxu0 0.0
    %176 = vmatpush1.msra.mxu0 %v157
    %177 = vmatprep.subr.mxu0 0.0
    %178 = vmatpush1.msra.mxu0 %v158
    %179 = vmatprep.subr.mxu0 0.0
    %180 = vmatpush1.msra.mxu0 %v159
    %181 = vmatprep.subr.mxu0 0.0
    %182 = vmatpush1.msra.mxu0 %v160
    %183 = vmatprep.subr.mxu0 0.0
    %184 = vmatpush1.msra.mxu0 %v161
    %185 = vmatprep.subr.mxu0 0.0
    %186 = vmatpush1.msra.mxu0 0.0
    %187 = vmatprep.subr.mxu0 0.0
    %188 = vmatpush1.msra.mxu0 0.0
    %189 = vmatprep.subr.mxu0 0.0
    %190 = vmatpush1.msra.mxu0 0.0
    %191 = vmatprep.subr.mxu0 0.0
    %192 = vmatpush1.msra.mxu0 0.0
    %193 = vmatprep.subr.mxu0 0.0
    %194 = vmatpush1.msra.mxu0 0.0
    %195 = vmatprep.subr.mxu0 0.0
    %196 = vmatpush1.msra.mxu0 0.0
    %197 = vmatprep.subr.mxu0 0.0
    %198 = vmatpush1.msra.mxu0 0.0
    %199 = vmatprep.subr.mxu0 0.0
    %200 = vmatpush1.msra.mxu0 0.0
    %201 = vmatprep.subr.mxu0 0.0
    %202 = vmatpush1.msra.mxu0 0.0
    %203 = vmatprep.subr.mxu0 0.0
    %204 = vmatpush1.msra.mxu0 0.0
    %205 = vmatprep.subr.mxu0 0.0
    %206 = vmatpush1.msra.mxu0 0.0
    %207 = vmatprep.subr.mxu0 0.0
    %208 = vmatpush1.msra.mxu0 0.0
    %209 = vmatprep.subr.mxu0 0.0
    %210 = vmatpush1.msra.mxu0 0.0
    %211 = vmatprep.subr.mxu0 0.0
    %212 = vmatpush1.msra.mxu0 0.0
    %213 = vmatprep.subr.mxu0 0.0
    %214 = vmatpush1.msra.mxu0 0.0
    %215 = vmatprep.subr.mxu0 0.0
    %216 = vmatpush1.msra.mxu0 0.0
    %217 = vmatprep.subr.mxu0 0.0
    %218 = vmatpush1.msra.mxu0 0.0
    %219 = vmatprep.subr.mxu0 0.0
    %220 = vmatpush1.msra.mxu0 0.0
    %221 = vmatprep.subr.mxu0 0.0
    %222 = vmatpush1.msra.mxu0 0.0
    %223 = vmatprep.subr.mxu0 0.0
    %224 = vmatpush1.msra.mxu0 0.0
    %225 = vmatprep.subr.mxu0 0.0
    %226 = vmatpush1.msra.mxu0 0.0
    %227 = vmatprep.subr.mxu0 0.0
    %228 = vmatpush1.msra.mxu0 0.0
    %229 = vmatprep.subr.mxu0 0.0
    %230 = vmatpush1.msra.mxu0 0.0
    %231 = vmatprep.subr.mxu0 0.0
    %232 = vmatpush1.msra.mxu0 0.0
    %233 = vmatprep.mubr.f32.mxu0 0.0
    %234 = vmatmul.mubr.f32.gmra.mrb[0].mxu0 %v164
    %v235 = vpop.f32.mrb[0].mxu0
    %v236 = vadd.f32 0.0, %v235
    %v237 = vpop.f32.mrb[0].mxu0
    %238 = vmatprep.mubr.f32.mxu0 0.0
    %239 = vmatmul.mubr.f32.gmra.mrb[0].mxu0 %v167
    %v240 = vpop.f32.mrb[0].mxu0
    %v241 = vadd.f32 0.0, %v240
    %v242 = vpop.f32.mrb[0].mxu0
    %243 = vdwg.mxu0
    %p244 = scmp.eq.s32.totalorder 0, 0
    // Predicated region
    $region26: #{tpu_custom_call.1} parent=1 // pred_check
      %p245 = pneg %p244
    $region27: #{tpu_custom_call.1} parent=1 // pred_check_branch
      %247 = sbr.rel (%p245) target = $region29
    $region28: #{tpu_custom_call.1} parent=1 // pred_region
      %248 = vst.msk [vmem:[#allocation8] sm:$0xff] %vm62, %v236
      %249 = vst.msk [vmem:[#allocation8 + $0x8] sm:$0xff] %vm62, %v241
    $region29: #{tpu_custom_call.1} parent=1 // pred_fallthru
      _
    %p250 = scmp.gt.s32.totalorder 0, 0
    // Predicated region
    $region30: #{tpu_custom_call.1} parent=1 // pred_check
      %p251 = pneg %p250
    $region31: #{tpu_custom_call.1} parent=1 // pred_check_branch
      %253 = sbr.rel (%p251) target = $region33
    $region32: #{tpu_custom_call.1} parent=1 // pred_region
      %v254 = vld [vmem:[#allocation8] sm:$0xff]
      %v255 = vld [vmem:[#allocation8 + $0x8] sm:$0xff]
      %v256 = vadd.f32 %v254, %v236
      %v257 = vadd.f32 %v255, %v241
      %258 = vst.msk [vmem:[#allocation8] sm:$0xff] %vm62, %v256
      %259 = vst.msk [vmem:[#allocation8 + $0x8] sm:$0xff] %vm62, %v257
    $region33: #{tpu_custom_call.1} parent=1 // pred_fallthru
      _
    // Predicated region
    $region34: #{tpu_custom_call.1} parent=1 // pred_check
      _
    $region35: #{tpu_custom_call.1} parent=1 // pred_check_branch
      %261 = sbr.rel (0) target = $region37
    $region36: #{tpu_custom_call.1} parent=1 // pred_region
      %s263 = ssub.s32 256, 256
      %264 = vsyncadd [#allocation4], %s263
      %s265 = sshll.u32 [#allocation8], 4
      %s266 = int_to_ptr.vmem [resolvable:$true] %s265
      %271 = dma.vmem_to_hbm [thread:$0]  %s266, 256, %s3, [#allocation4], 128, 128, 8
    $region37: #{tpu_custom_call.1} parent=1 // pred_fallthru
      _
    // Predicated region
    $region38: #{tpu_custom_call.1} parent=1 // pred_check
      _
    $region39: #{tpu_custom_call.1} parent=1 // pred_check_branch
      %273 = sbr.rel (0) target = $region41
    $region40: #{tpu_custom_call.1} parent=1 // pred_region
      %274 = dma.done [#allocation4], 256
    $region41: #{tpu_custom_call.1} parent=1 // pred_fallthru
      _
    %275 = vsyncpa [#allocation3], 1
    %276 = vsyncpa [#allocation6], 1
    %277 = vsyncpa [#allocation4], 1

</llo_original>
